<compile_context>
chip_gen: v7x
topology: tpu7x:2x2x1
jax: 0.10.0
libtpu: 0.0.40
codegen_flags: <defaults>
</compile_context>

<pallas_src>
import numpy as np
import jax
import jax.numpy as jnp
from jax.experimental import pallas as pl
from jax.experimental.pallas import tpu as pltpu

# ----------------------------- model hyper-params ----------------------------
DIM_Z = 32        # G.dim_z
SHARED_DIM = 16   # G.shared embedding dim
NUM_CLASSES = 16
CH = 32           # base generator channels
H0 = W0 = 4       # initial spatial size
UP = 2            # nearest-neighbour upsample factor
H1, W1 = H0 * UP, W0 * UP
OUT_CH = 3
CHW = CH * H0 * W0              # 512  (flat h, pixel-major / channel-minor)
KIN = DIM_Z + SHARED_DIM + 1    # 49  : [z+shift | y | 1]
KIN_PAD = 56                    # 49 -> 56 (multiple of 8 sublanes)
ONE_ROW = DIM_Z + SHARED_DIM    # row index of the constant-1 column in zy
NOUT = OUT_CH * H1 * W1         # 192 (channels-first flat NCHW image)
NOUT_PAD = 256                  # padded to a lane-dense multiple of 128


# ------------------------------- fused Pallas kernel -------------------------
def _biggan_fused_kernel(zy_ref, wbig_ref, wfull_ref, bfull_ref, o_ref):
    # stage 1: ONE bf16 MXU matmul produces pre-activation h, CBN gain, CBN bias
    #   zy   = [z+shift | y | 1 | 0-pad]                      (TB, 56)
    #   wbig = [ h (512) | 1+gain tiled (512) | bias tiled (512) ]
    hgb = jnp.dot(zy_ref[...], wbig_ref[...],
                  preferred_element_type=jnp.float32)          # (TB, 1536) f32
    h = hgb[:, :CHW]                   # 128-aligned lane slices (free)
    gain = hgb[:, CHW:2 * CHW]         # already includes the "+1"
    bias = hgb[:, 2 * CHW:]
    hmod = jnp.maximum(h * gain + bias, 0.0)                   # CBN + ReLU, lane-dense

    # stage 2: 2x nearest upsample + zero pad + 3x3 conv folded into the weight
    # matrix at init -> a single K=512 contraction, output channels-first.
    out = jnp.dot(hmod.astype(wfull_ref.dtype), wfull_ref[...],
                  preferred_element_type=jnp.float32)          # (TB, 256) f32
    o_ref[...] = jnp.tanh(out + bfull_ref[...])


def biggan_fused_forward(zy, wbig, wfull, bfull, tb):
    BP = zy.shape[0]
    assert BP % tb == 0
    return pl.pallas_call(
        _biggan_fused_kernel,
        out_shape=jax.ShapeDtypeStruct((BP, NOUT_PAD), jnp.float32),
        grid=(BP // tb,),
        in_specs=[
            pl.BlockSpec((tb, KIN_PAD), lambda i: (i, 0)),
            pl.BlockSpec(wbig.shape, lambda i: (0, 0)),    # resident across steps
            pl.BlockSpec(wfull.shape, lambda i: (0, 0)),   # resident across steps
            pl.BlockSpec(bfull.shape, lambda i: (0, 0)),
        ],
        out_specs=pl.BlockSpec((tb, NOUT_PAD), lambda i: (i, 0)),
        # batch axis is embarrassingly parallel (shards across v7x's two TCs
        # when the grid is > 1); weights + per-block buffers are far below the
        # scoped VMEM defaults on v5e/v6e/v7x, so no vmem_limit override needed.
        compiler_params=pltpu.CompilerParams(dimension_semantics=("parallel",)),
    )(zy, wbig, wfull, bfull)


# --------------------------- synthetic BigGAN "G" ----------------------------
class SyntheticBigGAN:
    """Small deterministic stand-in for the external BigGAN generator."""

    dim_z = DIM_Z

    def __init__(self, key):
        ks = jax.random.split(key, 7)
        s = 0.05
        # "natural" weights (used by the pure-JAX reference)
        self.embed = s * jax.random.normal(ks[0], (NUM_CLASSES, SHARED_DIM), jnp.float32)
        self.wz = s * jax.random.normal(ks[1], (DIM_Z, CHW), jnp.float32)
        self.wy = s * jax.random.normal(ks[2], (SHARED_DIM, CHW), jnp.float32)
        self.b1 = jnp.zeros((1, CHW), jnp.float32)
        self.wg = s * jax.random.normal(ks[3], (SHARED_DIM, CH), jnp.float32)
        self.wb = s * jax.random.normal(ks[4], (SHARED_DIM, CH), jnp.float32)
        self.wconv = s * jax.random.normal(ks[5], (3, 3, CH, OUT_CH), jnp.float32)
        self.bconv = jnp.zeros((1, OUT_CH), jnp.float32)

        # ---- packed weights for the fused kernel (built once, numpy side) ----
        # wbig rows = [z (32) | y (16) | const-1 | 0-pad(7)],
        # cols = [ h (512) | 1+gain tiled (512) | bias tiled (512) ]
        wbig = np.zeros((KIN_PAD, 3 * CHW), np.float32)
        wbig[:DIM_Z, :CHW] = np.asarray(self.wz)
        wbig[DIM_Z:DIM_Z + SHARED_DIM, :CHW] = np.asarray(self.wy)
        wbig[ONE_ROW, :CHW] = np.asarray(self.b1).reshape(-1)
        wbig[DIM_Z:DIM_Z + SHARED_DIM, CHW:2 * CHW] = np.tile(np.asarray(self.wg), (1, H0 * W0))
        wbig[ONE_ROW, CHW:2 * CHW] = 1.0                     # folds the "1 + gain"
        wbig[DIM_Z:DIM_Z + SHARED_DIM, 2 * CHW:] = np.tile(np.asarray(self.wb), (1, H0 * W0))
        self.wbig = jnp.asarray(wbig, dtype=jnp.bfloat16)

        # wfull: 2x nearest upsample + pad(1) + 3x3 VALID conv folded into one
        # (CHW, NOUT_PAD) matrix.  Row index = (iy*W0+ix)*CH + ci (same layout
        # as the h slab produced by wbig); col index = co*H1*W1 + oy*W1 + ox
        # (channels-first => NCHW output is a plain reshape).
        wconv_np = np.asarray(self.wconv)
        wfull = np.zeros((CHW, NOUT_PAD), np.float32)
        for oy in range(H1):
            for kh in range(3):
                sy = oy + kh - 1
                if not (0 <= sy < H1):
                    continue
                iy = sy // UP
                for ox in range(W1):
                    for kw in range(3):
                        sx = ox + kw - 1
                        if not (0 <= sx < W1):
                            continue
                        ix = sx // UP
                        in_off = (iy * W0 + ix) * CH
                        for co in range(OUT_CH):
                            col = co * (H1 * W1) + oy * W1 + ox
                            wfull[in_off:in_off + CH, col] += wconv_np[kh, kw, :, co]
        self.wfull = jnp.asarray(wfull, dtype=jnp.bfloat16)

        # conv bias broadcast into the channels-first flat layout, f32 (added
        # post-accumulation).  Padded columns stay 0 -> tanh(0)=0, sliced off.
        bfull = np.zeros((1, NOUT_PAD), np.float32)
        bconv_np = np.asarray(self.bconv).reshape(-1)
        for co in range(OUT_CH):
            bfull[0, co * (H1 * W1):(co + 1) * (H1 * W1)] = bconv_np[co]
        self.bfull = jnp.asarray(bfull)

    def shared(self, classes):
        # class embedding lookup (host/XLA glue, as in the PyTorch module)
        return jnp.take(self.embed, classes, axis=0)

    def __call__(self, z, y, shift):
        B = z.shape[0]
        # input-side glue: concat [z+shift, y, 1, 0-pad] -> (B, 56), pad batch
        # to a multiple of 8 sublanes (multiple of 128 for very large batches).
        zy = jnp.concatenate(
            [z + shift, y,
             jnp.ones((B, 1), jnp.float32),
             jnp.zeros((B, KIN_PAD - KIN), jnp.float32)], axis=-1)
        if B <= 128:
            BP = ((B + 7) // 8) * 8
        else:
            BP = ((B + 127) // 128) * 128
        if BP != B:
            zy = jnp.pad(zy, ((0, BP - B), (0, 0)))
        tb = min(BP, 128)
        zy = zy.astype(jnp.bfloat16)

        out = biggan_fused_forward(zy, self.wbig, self.wfull, self.bfull, tb)
        # drop batch/lane padding; channels-first layout => direct NCHW reshape
        return out[:B, :NOUT].reshape(B, OUT_CH, H1, W1)


# ------------------------------- the wrapper ---------------------------------
class BigGANWrapper:
    def __init__(self, G, target_classes=(5, 7)):
        self.G = G
        self.target_classes = jnp.asarray(target_classes, dtype=jnp.int32)
        self.dim_z = G.dim_z
        self.shift_in_w_space = False

    def mixed_classes(self, key, batch_size):
        # TODO(synk): PyTorch uses np.random.choice (non-deterministic host RNG);
        # we use jax.random.choice with an explicit key for determinism.
        if self.target_classes.ndim == 0:
            return jnp.broadcast_to(self.target_classes, (batch_size,))
        return jax.random.choice(key, self.target_classes, shape=(batch_size,))

    def forward(self, z, shift=None, *, key):
        classes = self.mixed_classes(key, z.shape[0])
        y = self.G.shared(classes)
        sh = jnp.zeros_like(z) if shift is None else shift
        return self.G(z, y, sh)


# ------------------------------ pure-JAX reference ---------------------------
def reference_forward(G, z, shift, y):
    h = (z + shift) @ G.wz + y @ G.wy + G.b1
    h = h.reshape(z.shape[0], H0 * W0, CH)
    gain = y @ G.wg
    bias = y @ G.wb
    h = jnp.maximum(h * (1.0 + gain)[:, None, :] + bias[:, None, :], 0.0)
    h = h.reshape(z.shape[0], H0, W0, CH)
    h = jnp.repeat(jnp.repeat(h, UP, axis=1), UP, axis=2)
    h = jnp.pad(h, ((0, 0), (1, 1), (1, 1), (0, 0)))
    out = jax.lax.conv_general_dilated(
        h, G.wconv, window_strides=(1, 1), padding="VALID",
        dimension_numbers=("NHWC", "HWIO", "NHWC"))
    out = jnp.tanh(out + G.bconv.reshape(1, 1, 1, OUT_CH))
    return jnp.transpose(out, (0, 3, 1, 2))


# ------------------------------------ main ------------------------------------
if __name__ == "__main__":
    key = jax.random.PRNGKey(0)
    k_g, k_z, k_s, k_cls = jax.random.split(key, 4)

    G = SyntheticBigGAN(k_g)
    wrapper = BigGANWrapper(G, target_classes=(5, 7))

    B = 2
    z = jax.random.normal(k_z, (B, DIM_Z), jnp.float32)
    shift = 0.1 * jax.random.normal(k_s, (B, DIM_Z), jnp.float32)

    out = wrapper.forward(z, shift, key=k_cls)
    out = jax.block_until_ready(out)

    # correctness check against a pure-JAX f32 reference (bf16 weights in the
    # kernel => tolerance loosened per the perf review)
    classes = wrapper.mixed_classes(k_cls, B)
    y = G.shared(classes)
    ref = reference_forward(G, z, shift, y)
    assert out.shape == (B, OUT_CH, H1, W1), out.shape
    assert jnp.allclose(out, ref, atol=2e-2, rtol=2e-2), float(jnp.max(jnp.abs(out - ref)))

    print("KERNEL_OK")
</pallas_src>

<mosaic_0001>
module attributes {stable_mosaic.version = 11 : i64} {
  func.func @_biggan_fused_kernel(%arg0: i32, %arg1: memref<8x56xbf16, #tpu.memory_space<vmem>>, %arg2: memref<56x1536xbf16, #tpu.memory_space<vmem>>, %arg3: memref<512x256xbf16, #tpu.memory_space<vmem>>, %arg4: memref<1x256xf32, #tpu.memory_space<vmem>>, %arg5: memref<8x256xf32, #tpu.memory_space<vmem>>) attributes {dimension_semantics = [#tpu.dimension_semantics<parallel>], iteration_bounds = array<i64: 1>, scalar_prefetch = 0 : i64, scratch_operands = 0 : i64, tpu.core_type = #tpu.core_type<tc>, window_params = [{transform_indices = @transform_0, window_bounds = array<i64: 8, 56>}, {pipeline_mode = #tpu.pipeline_mode<synchronous>, transform_indices = @transform_1, window_bounds = array<i64: 56, 1536>}, {pipeline_mode = #tpu.pipeline_mode<synchronous>, transform_indices = @transform_2, window_bounds = array<i64: 512, 256>}, {pipeline_mode = #tpu.pipeline_mode<synchronous>, transform_indices = @transform_3, window_bounds = array<i64: 1, 256>}, {transform_indices = @transform_4, window_bounds = array<i64: 8, 256>}]} {
    %c0 = arith.constant 0 : index
    %c0_0 = arith.constant 0 : index
    %0 = vector.load %arg1[%c0, %c0_0] : memref<8x56xbf16, #tpu.memory_space<vmem>>, vector<8x56xbf16>
    %c0_1 = arith.constant 0 : index
    %c0_2 = arith.constant 0 : index
    %1 = vector.load %arg2[%c0_1, %c0_2] : memref<56x1536xbf16, #tpu.memory_space<vmem>>, vector<56x1536xbf16>
    %cst = arith.constant dense<0.000000e+00> : vector<8x1536xf32>
    %2 = tpu.matmul %0, %1, %cst {dimension_numbers = #tpu.dot_dimension_numbers<[1], [0], [0], [1], [0, 0, 1, 1], [], []>} : vector<8x56xbf16>, vector<56x1536xbf16>, vector<8x1536xf32> -> vector<8x1536xf32>
    %3 = vector.extract_strided_slice %2 {offsets = [0, 0], sizes = [8, 512], strides = [1, 1]} : vector<8x1536xf32> to vector<8x512xf32>
    %4 = vector.extract_strided_slice %2 {offsets = [0, 512], sizes = [8, 512], strides = [1, 1]} : vector<8x1536xf32> to vector<8x512xf32>
    %5 = vector.extract_strided_slice %2 {offsets = [0, 1024], sizes = [8, 512], strides = [1, 1]} : vector<8x1536xf32> to vector<8x512xf32>
    %6 = arith.mulf %3, %4 : vector<8x512xf32>
    %7 = arith.addf %6, %5 : vector<8x512xf32>
    %cst_3 = arith.constant 0.000000e+00 : f32
    %8 = vector.broadcast %cst_3 : f32 to vector<8x512xf32>
    %9 = arith.maximumf %7, %8 : vector<8x512xf32>
    %10 = arith.truncf %9 : vector<8x512xf32> to vector<8x512xbf16>
    %c0_4 = arith.constant 0 : index
    %c0_5 = arith.constant 0 : index
    %11 = vector.load %arg3[%c0_4, %c0_5] : memref<512x256xbf16, #tpu.memory_space<vmem>>, vector<512x256xbf16>
    %cst_6 = arith.constant dense<0.000000e+00> : vector<8x256xf32>
    %12 = tpu.matmul %10, %11, %cst_6 {dimension_numbers = #tpu.dot_dimension_numbers<[1], [0], [0], [1], [0, 0, 1, 1], [], []>} : vector<8x512xbf16>, vector<512x256xbf16>, vector<8x256xf32> -> vector<8x256xf32>
    %c0_7 = arith.constant 0 : index
    %c0_8 = arith.constant 0 : index
    %13 = vector.load %arg4[%c0_7, %c0_8] : memref<1x256xf32, #tpu.memory_space<vmem>>, vector<1x256xf32>
    %14 = vector.broadcast %13 : vector<1x256xf32> to vector<8x256xf32>
    %15 = arith.addf %12, %14 : vector<8x256xf32>
    %16 = math.tanh %15 : vector<8x256xf32>
    %c0_9 = arith.constant 0 : index
    %c0_10 = arith.constant 0 : index
    %17 = vector.load %arg5[%c0_9, %c0_10] : memref<8x256xf32, #tpu.memory_space<vmem>>, vector<8x256xf32>
    tpu.vector_store %arg5[%c0_9, %c0_10], %16 {strides = array<i32>} : memref<8x256xf32, #tpu.memory_space<vmem>>, vector<8x256xf32>,
    return
  }
  func.func @transform_0(%arg0: i32) -> (i32, i32) {
    %c0_i32 = arith.constant 0 : i32
    %c0_i32_0 = arith.constant 0 : i32
    return %arg0, %c0_i32 : i32, i32
  }
  func.func @transform_1(%arg0: i32) -> (i32, i32) {
    %c0_i32 = arith.constant 0 : i32
    %c0_i32_0 = arith.constant 0 : i32
    %c0_i32_1 = arith.constant 0 : i32
    return %c0_i32, %c0_i32_0 : i32, i32
  }
  func.func @transform_2(%arg0: i32) -> (i32, i32) {
    %c0_i32 = arith.constant 0 : i32
    %c0_i32_0 = arith.constant 0 : i32
    %c0_i32_1 = arith.constant 0 : i32
    return %c0_i32, %c0_i32_0 : i32, i32
  }
  func.func @transform_3(%arg0: i32) -> (i32, i32) {
    %c0_i32 = arith.constant 0 : i32
    %c0_i32_0 = arith.constant 0 : i32
    %c0_i32_1 = arith.constant 0 : i32
    return %c0_i32, %c0_i32_0 : i32, i32
  }
  func.func @transform_4(%arg0: i32) -> (i32, i32) {
    %c0_i32 = arith.constant 0 : i32
    %c0_i32_0 = arith.constant 0 : i32
    return %arg0, %c0_i32 : i32, i32
  }
}

</mosaic_0001>

<llo_original>
// kernel: tpu_custom_call.1
$region0: #{tpu_custom_call.1}
  #allocation0 [shape = 'u32[]', space=smem, size = 0x4, offset = 0x4, fixed_abs, tag = 'smem constant byte address 0x4 - core index']
  #allocation1 [shape = 'u32[144,128]{1,0:T(1,128)}', space=vmem, size = 0x12000, scoped, tag = 'internal scratch']
  %s0 = inlined_call_operand.hbm [shape: bf16[8,56], index: 0, kind: input, shape index: {}]
  %s1 = inlined_call_operand.hbm [shape: bf16[56,1536], index: 1, kind: input, shape index: {}]
  %s2 = inlined_call_operand.hbm [shape: bf16[512,256], index: 2, kind: input, shape index: {}]
  %s3 = inlined_call_operand.vmem [shape: f32[1,256], index: 3, kind: input, shape index: {}]
  %s4 = inlined_call_operand.hbm [shape: f32[8,256], index: 4, kind: output, shape index: {}]
  %s5 = sld [smem:[#allocation0]]
  $region38: #{tpu_custom_call.1} parent=0
    _
  %s7 = ssub.s32 1, %s5
  %s8 = scalar_select 0, %s7, %s5
  $region1: #{tpu_custom_call.1} parent=0
    #allocation2 [shape = 'u8[2048]{0}', space=vmem, size = 0x800, scoped, tag = 'input window, operand 0, single buffered']
    #allocation3 [shape = 's32[1]{0}', space=sflag, size = 0x4, scoped, tag = 'scoped memory for tpu_custom_call.1']
    #allocation4 [shape = 's32[1]{0}', space=sflag, size = 0x4, scoped, tag = 'scoped memory for tpu_custom_call.1']
    #allocation5 [shape = 'u8[172032]{0}', space=vmem, size = 0x2a000, scoped, tag = 'input window, operand 1, single buffered']
    #allocation6 [shape = 's32[1]{0}', space=sflag, size = 0x4, scoped, tag = 'scoped memory for tpu_custom_call.1']
    #allocation7 [shape = 'u8[262144]{0}', space=vmem, size = 0x40000, scoped, tag = 'input window, operand 2, single buffered']
    #allocation8 [shape = 'u8[8192]{0}', space=vmem, size = 0x2000, scoped, tag = 'output window, operand 0, single buffered']
    %9 = vsyncpa [#allocation3], 0
    %10 = vsyncpa [#allocation6], 0
    %11 = vsyncpa [#allocation4], 0
    // Predicated region
    $region2: #{tpu_custom_call.1} parent=1 // pred_check
      _
    $region3: #{tpu_custom_call.1} parent=1 // pred_check_branch
      %13 = sbr.rel (0) target = $region5
    $region4: #{tpu_custom_call.1} parent=1 // pred_region
      %s15 = ssub.s32 64, 64
      %16 = vsyncadd [#allocation3], %s15
      %s18 = sshll.u32 [#allocation2], 4
      %s19 = int_to_ptr.vmem [resolvable:$true] %s18
      %21 = dma.hbm_to_vmem [thread:$0]  %s0, 64, %s19, [#allocation3]
    $region5: #{tpu_custom_call.1} parent=1 // pred_fallthru
      _
    // Predicated region
    $region6: #{tpu_custom_call.1} parent=1 // pred_check
      _
    $region7: #{tpu_custom_call.1} parent=1 // pred_check_branch
      %23 = sbr.rel (0) target = $region9
    $region8: #{tpu_custom_call.1} parent=1 // pred_region
      %s25 = ssub.s32 5376, 5376
      %26 = vsyncadd [#allocation6], %s25
      %s27 = sshll.u32 [#allocation5], 4
      %s28 = int_to_ptr.vmem [resolvable:$true] %s27
      %33 = dma.hbm_to_vmem [thread:$0]  %s1, 5376, %s28, [#allocation6], 768, 768, 48
    $region9: #{tpu_custom_call.1} parent=1 // pred_fallthru
      _
    // Predicated region
    $region10: #{tpu_custom_call.1} parent=1 // pred_check
      _
    $region11: #{tpu_custom_call.1} parent=1 // pred_check_branch
      %35 = sbr.rel (0) target = $region13
    $region12: #{tpu_custom_call.1} parent=1 // pred_region
      %s37 = ssub.s32 8192, 8192
      %38 = vsyncadd [#allocation6], %s37
      %s39 = sshll.u32 [#allocation7], 4
      %s40 = int_to_ptr.vmem [resolvable:$true] %s39
      %45 = dma.hbm_to_vmem [thread:$0]  %s2, 8192, %s40, [#allocation6], 128, 128, 8
    $region13: #{tpu_custom_call.1} parent=1 // pred_fallthru
      _
    // Predicated region
    $region14: #{tpu_custom_call.1} parent=1 // pred_check
      _
    $region15: #{tpu_custom_call.1} parent=1 // pred_check_branch
      %47 = sbr.rel (0) target = $region17
    $region16: #{tpu_custom_call.1} parent=1 // pred_region
      _
    $region17: #{tpu_custom_call.1} parent=1 // pred_fallthru
      _
    // Predicated region
    $region18: #{tpu_custom_call.1} parent=1 // pred_check
      _
    $region19: #{tpu_custom_call.1} parent=1 // pred_check_branch
      %49 = sbr.rel (0) target = $region21
    $region20: #{tpu_custom_call.1} parent=1 // pred_region
      %50 = dma.done [#allocation3], 64
    $region21: #{tpu_custom_call.1} parent=1 // pred_fallthru
      _
    // Predicated region
    $region22: #{tpu_custom_call.1} parent=1 // pred_check
      _
    $region23: #{tpu_custom_call.1} parent=1 // pred_check_branch
      %52 = sbr.rel (0) target = $region25
    $region24: #{tpu_custom_call.1} parent=1 // pred_region
      %53 = dma.done [#allocation6], 5376
    $region25: #{tpu_custom_call.1} parent=1 // pred_fallthru
      _
    // Predicated region
    $region26: #{tpu_custom_call.1} parent=1 // pred_check
      _
    $region27: #{tpu_custom_call.1} parent=1 // pred_check_branch
      %55 = sbr.rel (0) target = $region29
    $region28: #{tpu_custom_call.1} parent=1 // pred_region
      %56 = dma.done [#allocation6], 8192
    $region29: #{tpu_custom_call.1} parent=1 // pred_fallthru
      _
    %v58 = vld [vmem:[#allocation2] sm:$0xf]
    %v59 = vld [vmem:[#allocation5] sm:$0xff]
    %v60 = vld [vmem:[#allocation5 + $0x8] sm:$0xff]
    %v61 = vld [vmem:[#allocation5 + $0x10] sm:$0xff]
    %v62 = vld [vmem:[#allocation5 + $0x18] sm:$0xff]
    %v63 = vld [vmem:[#allocation5 + $0x20] sm:$0xff]
    %v64 = vld [vmem:[#allocation5 + $0x28] sm:$0xff]
    %v65 = vld [vmem:[#allocation5 + $0x30] sm:$0xff]
    %v66 = vld [vmem:[#allocation5 + $0x38] sm:$0xff]
    %v67 = vld [vmem:[#allocation5 + $0x40] sm:$0xff]
    %v68 = vld [vmem:[#allocation5 + $0x48] sm:$0xff]
    %v69 = vld [vmem:[#allocation5 + $0x50] sm:$0xff]
    %v70 = vld [vmem:[#allocation5 + $0x58] sm:$0xff]
    %v71 = vld [vmem:[#allocation5 + $0x60] sm:$0xff]
    %v72 = vld [vmem:[#allocation5 + $0x68] sm:$0xff]
    %v73 = vld [vmem:[#allocation5 + $0x70] sm:$0xff]
    %v74 = vld [vmem:[#allocation5 + $0x78] sm:$0xff]
    %v75 = vld [vmem:[#allocation5 + $0x80] sm:$0xff]
    %v76 = vld [vmem:[#allocation5 + $0x88] sm:$0xff]
    %v77 = vld [vmem:[#allocation5 + $0x90] sm:$0xff]
    %v78 = vld [vmem:[#allocation5 + $0x98] sm:$0xff]
    %v79 = vld [vmem:[#allocation5 + $0xa0] sm:$0xff]
    %v80 = vld [vmem:[#allocation5 + $0xa8] sm:$0xff]
    %v81 = vld [vmem:[#allocation5 + $0xb0] sm:$0xff]
    %v82 = vld [vmem:[#allocation5 + $0xb8] sm:$0xff]
    %v83 = vld [vmem:[#allocation5 + $0xc0] sm:$0xff]
    %v84 = vld [vmem:[#allocation5 + $0xc8] sm:$0xff]
    %v85 = vld [vmem:[#allocation5 + $0xd0] sm:$0xff]
    %v86 = vld [vmem:[#allocation5 + $0xd8] sm:$0xff]
    %v87 = vld [vmem:[#allocation5 + $0xe0] sm:$0xff]
    %v88 = vld [vmem:[#allocation5 + $0xe8] sm:$0xff]
    %v89 = vld [vmem:[#allocation5 + $0xf0] sm:$0xff]
    %v90 = vld [vmem:[#allocation5 + $0xf8] sm:$0xff]
    %v91 = vld [vmem:[#allocation5 + $0x100] sm:$0xff]
    %v92 = vld [vmem:[#allocation5 + $0x108] sm:$0xff]
    %v93 = vld [vmem:[#allocation5 + $0x110] sm:$0xff]
    %v94 = vld [vmem:[#allocation5 + $0x118] sm:$0xff]
    %v95 = vld [vmem:[#allocation5 + $0x120] sm:$0xff]
    %v96 = vld [vmem:[#allocation5 + $0x128] sm:$0xff]
    %v97 = vld [vmem:[#allocation5 + $0x130] sm:$0xff]
    %v98 = vld [vmem:[#allocation5 + $0x138] sm:$0xff]
    %v99 = vld [vmem:[#allocation5 + $0x140] sm:$0xff]
    %v100 = vld [vmem:[#allocation5 + $0x148] sm:$0xff]
    %v143 = vunpack.c.l.b16 %v59
    %v144 = vunpack.c.h.b16 %v59
    %v145 = vunpack.c.l.b16 %v60
    %v146 = vunpack.c.h.b16 %v60
    %v147 = vunpack.c.l.b16 %v61
    %v148 = vunpack.c.h.b16 %v61
    %v149 = vunpack.c.l.b16 %v62
    %v150 = vunpack.c.h.b16 %v62
    %v151 = vunpack.c.l.b16 %v63
    %v152 = vunpack.c.h.b16 %v63
    %v153 = vunpack.c.l.b16 %v64
    %v154 = vunpack.c.h.b16 %v64
    %v155 = vunpack.c.l.b16 %v65
    %v156 = vunpack.c.h.b16 %v65
    %v157 = vunpack.c.l.b16 %v66
    %v158 = vunpack.c.h.b16 %v66
    %v159 = vunpack.c.l.b16 %v67
    %v160 = vunpack.c.h.b16 %v67
    %v161 = vunpack.c.l.b16 %v68
    %v162 = vunpack.c.h.b16 %v68
    %v163 = vunpack.c.l.b16 %v69
    %v164 = vunpack.c.h.b16 %v69
    %v165 = vunpack.c.l.b16 %v70
    %v166 = vunpack.c.h.b16 %v70
    %v167 = vunpack.c.l.b16 %v71
    %v168 = vunpack.c.h.b16 %v71
    %v169 = vunpack.c.l.b16 %v72
    %v170 = vunpack.c.h.b16 %v72
    %v171 = vunpack.c.l.b16 %v73
    %v172 = vunpack.c.h.b16 %v73
    %v173 = vunpack.c.l.b16 %v74
    %v174 = vunpack.c.h.b16 %v74
    %v175 = vunpack.c.l.b16 %v75
    %v176 = vunpack.c.h.b16 %v75
    %v177 = vunpack.c.l.b16 %v76
    %v178 = vunpack.c.h.b16 %v76
    %v179 = vunpack.c.l.b16 %v77
    %v180 = vunpack.c.h.b16 %v77
    %v181 = vunpack.c.l.b16 %v78
    %v182 = vunpack.c.h.b16 %v78
    %v183 = vunpack.c.l.b16 %v79
    %v184 = vunpack.c.h.b16 %v79
    %v185 = vunpack.c.l.b16 %v80
    %v186 = vunpack.c.h.b16 %v80
    %v187 = vunpack.c.l.b16 %v81
    %v188 = vunpack.c.h.b16 %v81
    %v189 = vunpack.c.l.b16 %v82
    %v190 = vunpack.c.h.b16 %v82
    %v191 = vunpack.c.l.b16 %v83
    %v192 = vunpack.c.h.b16 %v83
    %v193 = vunpack.c.l.b16 %v84
    %v194 = vunpack.c.h.b16 %v84
    %v195 = vunpack.c.l.b16 %v85
    %v196 = vunpack.c.h.b16 %v85
    %v197 = vunpack.c.l.b16 %v86
    %v198 = vunpack.c.h.b16 %v86
    %v199 = vunpack.c.l.b16 %v87
    %v200 = vunpack.c.h.b16 %v87
    %v201 = vunpack.c.l.b16 %v88
    %v202 = vunpack.c.h.b16 %v88
    %v203 = vunpack.c.l.b16 %v89
    %v204 = vunpack.c.h.b16 %v89
    %v205 = vunpack.c.l.b16 %v90
    %v206 = vunpack.c.h.b16 %v90
    %v207 = vunpack.c.l.b16 %v91
    %v208 = vunpack.c.h.b16 %v91
    %v209 = vunpack.c.l.b16 %v92
    %v210 = vunpack.c.h.b16 %v92
    %v211 = vunpack.c.l.b16 %v93
    %v212 = vunpack.c.h.b16 %v93
    %v213 = vunpack.c.l.b16 %v94
    %v214 = vunpack.c.h.b16 %v94
    %v215 = vunpack.c.l.b16 %v95
    %v216 = vunpack.c.h.b16 %v95
    %v217 = vunpack.c.l.b16 %v96
    %v218 = vunpack.c.h.b16 %v96
    %v219 = vunpack.c.l.b16 %v97
    %v220 = vunpack.c.h.b16 %v97
    %v221 = vunpack.c.l.b16 %v98
    %v222 = vunpack.c.h.b16 %v98
    %v223 = vunpack.c.l.b16 %v99
    %v224 = vunpack.c.h.b16 %v99
    %v225 = vunpack.c.l.b16 %v100
    %v226 = vunpack.c.h.b16 %v100
    %v227 = vpack.c.b16 %v155, %v143
    %v228 = vpack.c.b16 %v156, %v144
    %v229 = vpack.c.b16 %v157, %v145
    %v230 = vpack.c.b16 %v158, %v146
    %v231 = vpack.c.b16 %v159, %v147
    %v232 = vpack.c.b16 %v160, %v148
    %v233 = vpack.c.b16 %v161, %v149
    %v234 = vpack.c.b16 %v162, %v150
    %v235 = vpack.c.b16 %v163, %v151
    %v236 = vpack.c.b16 %v164, %v152
    %v237 = vpack.c.b16 %v165, %v153
    %v238 = vpack.c.b16 %v166, %v154
    %v239 = vpack.c.b16 %v179, %v167
    %v240 = vpack.c.b16 %v180, %v168
    %v241 = vpack.c.b16 %v181, %v169
    %v242 = vpack.c.b16 %v182, %v170
    %v243 = vpack.c.b16 %v183, %v171
    %v244 = vpack.c.b16 %v184, %v172
    %v245 = vpack.c.b16 %v185, %v173
    %v246 = vpack.c.b16 %v186, %v174
    %v247 = vpack.c.b16 %v187, %v175
    %v248 = vpack.c.b16 %v188, %v176
    %v249 = vpack.c.b16 %v189, %v177
    %v250 = vpack.c.b16 %v190, %v178
    %v251 = vpack.c.b16 %v203, %v191
    %v252 = vpack.c.b16 %v204, %v192
    %v253 = vpack.c.b16 %v205, %v193
    %v254 = vpack.c.b16 %v206, %v194
    %v255 = vpack.c.b16 %v207, %v195
    %v256 = vpack.c.b16 %v208, %v196
    %v257 = vpack.c.b16 %v209, %v197
    %v258 = vpack.c.b16 %v210, %v198
    %v259 = vpack.c.b16 %v211, %v199
    %v260 = vpack.c.b16 %v212, %v200
    %v261 = vpack.c.b16 %v213, %v201
    %v262 = vpack.c.b16 %v214, %v202
    %v263 = vpack.c.b16 %v215, %v215
    %v264 = vpack.c.b16 %v216, %v216
    %v265 = vpack.c.b16 %v217, %v217
    %v266 = vpack.c.b16 %v218, %v218
    %v267 = vpack.c.b16 %v219, %v219
    %v268 = vpack.c.b16 %v220, %v220
    %v269 = vpack.c.b16 %v221, %v221
    %v270 = vpack.c.b16 %v222, %v222
    %v271 = vpack.c.b16 %v223, %v223
    %v272 = vpack.c.b16 %v224, %v224
    %v273 = vpack.c.b16 %v225, %v225
    %v274 = vpack.c.b16 %v226, %v226
    %vm311 = vcmask 457728
    %v313 = vsel %vm311, %v58, 0
    %vm315 = vcmask 1043456
    %v317 = vsel %vm315, %v263, 0
    %v320 = vsel %vm315, %v264, 0
    %v323 = vsel %vm315, %v265, 0
    %v326 = vsel %vm315, %v266, 0
    %v329 = vsel %vm315, %v267, 0
    %v332 = vsel %vm315, %v268, 0
    %v335 = vsel %vm315, %v269, 0
    %v338 = vsel %vm315, %v270, 0
    %v341 = vsel %vm315, %v271, 0
    %v344 = vsel %vm315, %v272, 0
    %v347 = vsel %vm315, %v273, 0
    %v350 = vsel %vm315, %v274, 0
    %352 = vmatprep.subr.bf16.mxu0 %v228
    %353 = vmatpush1.bf16.msra.mxu0 %v227
    %354 = vmatprep.subr.bf16.mxu0 %v240
    %355 = vmatpush1.bf16.msra.mxu0 %v239
    %356 = vmatprep.subr.bf16.mxu0 %v252
    %357 = vmatpush1.bf16.msra.mxu0 %v251
    %358 = vmatprep.subr.bf16.mxu0 %v320
    %359 = vmatpush1.bf16.msra.mxu0 %v317
    %360 = vmatprep.subr.bf16.mxu0 0
    %361 = vmatpush1.bf16.msra.mxu0 0
    %362 = vmatprep.subr.bf16.mxu0 0
    %363 = vmatpush1.bf16.msra.mxu0 0
    %364 = vmatprep.subr.bf16.mxu0 0
    %365 = vmatpush1.bf16.msra.mxu0 0
    %366 = vmatprep.subr.bf16.mxu0 0
    %367 = vmatpush1.bf16.msra.mxu0 0
    %368 = vmatprep.subr.bf16.mxu0 0
    %369 = vmatpush1.bf16.msra.mxu0 0
    %370 = vmatprep.subr.bf16.mxu0 0
    %371 = vmatpush1.bf16.msra.mxu0 0
    %372 = vmatprep.subr.bf16.mxu0 0
    %373 = vmatpush1.bf16.msra.mxu0 0
    %374 = vmatprep.subr.bf16.mxu0 0
    %375 = vmatpush1.bf16.msra.mxu0 0
    %376 = vmatprep.subr.bf16.mxu0 0
    %377 = vmatpush1.bf16.msra.mxu0 0
    %378 = vmatprep.subr.bf16.mxu0 0
    %379 = vmatpush1.bf16.msra.mxu0 0
    %380 = vmatprep.subr.bf16.mxu0 0
    %381 = vmatpush1.bf16.msra.mxu0 0
    %382 = vmatprep.subr.bf16.mxu0 0
    %383 = vmatpush1.bf16.msra.mxu0 0
    %384 = vmatprep.mubr.bf16.mxu0 0
    %385 = vmatmul.mubr.bf16.gmra.mrb[0].mxu0 %v313
    %v386 = vpop.f32.mrb[0].mxu0
    %v387 = vadd.f32 0.0, %v386
    %v388 = vpop.f32.mrb[0].mxu0
    %v389 = vadd.f32 0.0, %v388
    %v390 = vpop.f32.mrb[0].mxu0
    %v391 = vpop.f32.mrb[0].mxu0
    %392 = vdwg.mxu0
    %393 = vmatprep.subr.bf16.mxu0 %v230
    %394 = vmatpush1.bf16.msra.mxu0 %v229
    %395 = vmatprep.subr.bf16.mxu0 %v242
    %396 = vmatpush1.bf16.msra.mxu0 %v241
    %397 = vmatprep.subr.bf16.mxu0 %v254
    %398 = vmatpush1.bf16.msra.mxu0 %v253
    %399 = vmatprep.subr.bf16.mxu0 %v326
    %400 = vmatpush1.bf16.msra.mxu0 %v323
    %401 = vmatprep.subr.bf16.mxu0 0
    %402 = vmatpush1.bf16.msra.mxu0 0
    %403 = vmatprep.subr.bf16.mxu0 0
    %404 = vmatpush1.bf16.msra.mxu0 0
    %405 = vmatprep.subr.bf16.mxu0 0
    %406 = vmatpush1.bf16.msra.mxu0 0
    %407 = vmatprep.subr.bf16.mxu0 0
    %408 = vmatpush1.bf16.msra.mxu0 0
    %409 = vmatprep.subr.bf16.mxu0 0
    %410 = vmatpush1.bf16.msra.mxu0 0
    %411 = vmatprep.subr.bf16.mxu0 0
    %412 = vmatpush1.bf16.msra.mxu0 0
    %413 = vmatprep.subr.bf16.mxu0 0
    %414 = vmatpush1.bf16.msra.mxu0 0
    %415 = vmatprep.subr.bf16.mxu0 0
    %416 = vmatpush1.bf16.msra.mxu0 0
    %417 = vmatprep.subr.bf16.mxu0 0
    %418 = vmatpush1.bf16.msra.mxu0 0
    %419 = vmatprep.subr.bf16.mxu0 0
    %420 = vmatpush1.bf16.msra.mxu0 0
    %421 = vmatprep.subr.bf16.mxu0 0
    %422 = vmatpush1.bf16.msra.mxu0 0
    %423 = vmatprep.subr.bf16.mxu0 0
    %424 = vmatpush1.bf16.msra.mxu0 0
    %425 = vmatprep.mubr.bf16.mxu0 0
    %426 = vmatmul.mubr.bf16.gmra.mrb[0].mxu0 %v313
    %v427 = vpop.f32.mrb[0].mxu0
    %v428 = vadd.f32 0.0, %v427
    %v429 = vpop.f32.mrb[0].mxu0
    %v430 = vadd.f32 0.0, %v429
    %v431 = vpop.f32.mrb[0].mxu0
    %v432 = vpop.f32.mrb[0].mxu0
    %433 = vdwg.mxu0
    %434 = vmatprep.subr.bf16.mxu0 %v232
    %435 = vmatpush1.bf16.msra.mxu0 %v231
    %436 = vmatprep.subr.bf16.mxu0 %v244
    %437 = vmatpush1.bf16.msra.mxu0 %v243
    %438 = vmatprep.subr.bf16.mxu0 %v256
    %439 = vmatpush1.bf16.msra.mxu0 %v255
    %440 = vmatprep.subr.bf16.mxu0 %v332
    %441 = vmatpush1.bf16.msra.mxu0 %v329
    %442 = vmatprep.subr.bf16.mxu0 0
    %443 = vmatpush1.bf16.msra.mxu0 0
    %444 = vmatprep.subr.bf16.mxu0 0
    %445 = vmatpush1.bf16.msra.mxu0 0
    %446 = vmatprep.subr.bf16.mxu0 0
    %447 = vmatpush1.bf16.msra.mxu0 0
    %448 = vmatprep.subr.bf16.mxu0 0
    %449 = vmatpush1.bf16.msra.mxu0 0
    %450 = vmatprep.subr.bf16.mxu0 0
    %451 = vmatpush1.bf16.msra.mxu0 0
    %452 = vmatprep.subr.bf16.mxu0 0
    %453 = vmatpush1.bf16.msra.mxu0 0
    %454 = vmatprep.subr.bf16.mxu0 0
    %455 = vmatpush1.bf16.msra.mxu0 0
    %456 = vmatprep.subr.bf16.mxu0 0
    %457 = vmatpush1.bf16.msra.mxu0 0
    %458 = vmatprep.subr.bf16.mxu0 0
    %459 = vmatpush1.bf16.msra.mxu0 0
    %460 = vmatprep.subr.bf16.mxu0 0
    %461 = vmatpush1.bf16.msra.mxu0 0
    %462 = vmatprep.subr.bf16.mxu0 0
    %463 = vmatpush1.bf16.msra.mxu0 0
    %464 = vmatprep.subr.bf16.mxu0 0
    %465 = vmatpush1.bf16.msra.mxu0 0
    %466 = vmatprep.mubr.bf16.mxu0 0
    %467 = vmatmul.mubr.bf16.gmra.mrb[0].mxu0 %v313
    %v468 = vpop.f32.mrb[0].mxu0
    %v469 = vadd.f32 0.0, %v468
    %v470 = vpop.f32.mrb[0].mxu0
    %v471 = vadd.f32 0.0, %v470
    %v472 = vpop.f32.mrb[0].mxu0
    %v473 = vpop.f32.mrb[0].mxu0
    %474 = vdwg.mxu0
    %475 = vmatprep.subr.bf16.mxu0 %v234
    %476 = vmatpush1.bf16.msra.mxu0 %v233
    %477 = vmatprep.subr.bf16.mxu0 %v246
    %478 = vmatpush1.bf16.msra.mxu0 %v245
    %479 = vmatprep.subr.bf16.mxu0 %v258
    %480 = vmatpush1.bf16.msra.mxu0 %v257
    %481 = vmatprep.subr.bf16.mxu0 %v338
    %482 = vmatpush1.bf16.msra.mxu0 %v335
    %483 = vmatprep.subr.bf16.mxu0 0
    %484 = vmatpush1.bf16.msra.mxu0 0
    %485 = vmatprep.subr.bf16.mxu0 0
    %486 = vmatpush1.bf16.msra.mxu0 0
    %487 = vmatprep.subr.bf16.mxu0 0
    %488 = vmatpush1.bf16.msra.mxu0 0
    %489 = vmatprep.subr.bf16.mxu0 0
    %490 = vmatpush1.bf16.msra.mxu0 0
    %491 = vmatprep.subr.bf16.mxu0 0
    %492 = vmatpush1.bf16.msra.mxu0 0
    %493 = vmatprep.subr.bf16.mxu0 0
    %494 = vmatpush1.bf16.msra.mxu0 0
    %495 = vmatprep.subr.bf16.mxu0 0
    %496 = vmatpush1.bf16.msra.mxu0 0
    %497 = vmatprep.subr.bf16.mxu0 0
    %498 = vmatpush1.bf16.msra.mxu0 0
    %499 = vmatprep.subr.bf16.mxu0 0
    %500 = vmatpush1.bf16.msra.mxu0 0
    %501 = vmatprep.subr.bf16.mxu0 0
    %502 = vmatpush1.bf16.msra.mxu0 0
    %503 = vmatprep.subr.bf16.mxu0 0
    %504 = vmatpush1.bf16.msra.mxu0 0
    %505 = vmatprep.subr.bf16.mxu0 0
    %506 = vmatpush1.bf16.msra.mxu0 0
    %507 = vmatprep.mubr.bf16.mxu0 0
    %508 = vmatmul.mubr.bf16.gmra.mrb[0].mxu0 %v313
    %v509 = vpop.f32.mrb[0].mxu0
    %v510 = vadd.f32 0.0, %v509
    %v511 = vpop.f32.mrb[0].mxu0
    %v512 = vadd.f32 0.0, %v511
    %v513 = vpop.f32.mrb[0].mxu0
    %v514 = vpop.f32.mrb[0].mxu0
    %515 = vdwg.mxu0
    %516 = vmatprep.subr.bf16.mxu0 %v236
    %517 = vmatpush1.bf16.msra.mxu0 %v235
    %518 = vmatprep.subr.bf16.mxu0 %v248
    %519 = vmatpush1.bf16.msra.mxu0 %v247
    %520 = vmatprep.subr.bf16.mxu0 %v260
    %521 = vmatpush1.bf16.msra.mxu0 %v259
    %522 = vmatprep.subr.bf16.mxu0 %v344
    %523 = vmatpush1.bf16.msra.mxu0 %v341
    %524 = vmatprep.subr.bf16.mxu0 0
    %525 = vmatpush1.bf16.msra.mxu0 0
    %526 = vmatprep.subr.bf16.mxu0 0
    %527 = vmatpush1.bf16.msra.mxu0 0
    %528 = vmatprep.subr.bf16.mxu0 0
    %529 = vmatpush1.bf16.msra.mxu0 0
    %530 = vmatprep.subr.bf16.mxu0 0
    %531 = vmatpush1.bf16.msra.mxu0 0
    %532 = vmatprep.subr.bf16.mxu0 0
    %533 = vmatpush1.bf16.msra.mxu0 0
    %534 = vmatprep.subr.bf16.mxu0 0
    %535 = vmatpush1.bf16.msra.mxu0 0
    %536 = vmatprep.subr.bf16.mxu0 0
    %537 = vmatpush1.bf16.msra.mxu0 0
    %538 = vmatprep.subr.bf16.mxu0 0
    %539 = vmatpush1.bf16.msra.mxu0 0
    %540 = vmatprep.subr.bf16.mxu0 0
    %541 = vmatpush1.bf16.msra.mxu0 0
    %542 = vmatprep.subr.bf16.mxu0 0
    %543 = vmatpush1.bf16.msra.mxu0 0
    %544 = vmatprep.subr.bf16.mxu0 0
    %545 = vmatpush1.bf16.msra.mxu0 0
    %546 = vmatprep.subr.bf16.mxu0 0
    %547 = vmatpush1.bf16.msra.mxu0 0
    %548 = vmatprep.mubr.bf16.mxu0 0
    %549 = vmatmul.mubr.bf16.gmra.mrb[0].mxu0 %v313
    %v550 = vpop.f32.mrb[0].mxu0
    %v551 = vadd.f32 0.0, %v550
    %v552 = vpop.f32.mrb[0].mxu0
    %v553 = vadd.f32 0.0, %v552
    %v554 = vpop.f32.mrb[0].mxu0
    %v555 = vpop.f32.mrb[0].mxu0
    %556 = vdwg.mxu0
    %557 = vmatprep.subr.bf16.mxu0 %v238
    %558 = vmatpush1.bf16.msra.mxu0 %v237
    %559 = vmatprep.subr.bf16.mxu0 %v250
    %560 = vmatpush1.bf16.msra.mxu0 %v249
    %561 = vmatprep.subr.bf16.mxu0 %v262
    %562 = vmatpush1.bf16.msra.mxu0 %v261
    %563 = vmatprep.subr.bf16.mxu0 %v350
    %564 = vmatpush1.bf16.msra.mxu0 %v347
    %565 = vmatprep.subr.bf16.mxu0 0
    %566 = vmatpush1.bf16.msra.mxu0 0
    %567 = vmatprep.subr.bf16.mxu0 0
    %568 = vmatpush1.bf16.msra.mxu0 0
    %569 = vmatprep.subr.bf16.mxu0 0
    %570 = vmatpush1.bf16.msra.mxu0 0
    %571 = vmatprep.subr.bf16.mxu0 0
    %572 = vmatpush1.bf16.msra.mxu0 0
    %573 = vmatprep.subr.bf16.mxu0 0
    %574 = vmatpush1.bf16.msra.mxu0 0
    %575 = vmatprep.subr.bf16.mxu0 0
    %576 = vmatpush1.bf16.msra.mxu0 0
    %577 = vmatprep.subr.bf16.mxu0 0
    %578 = vmatpush1.bf16.msra.mxu0 0
    %579 = vmatprep.subr.bf16.mxu0 0
    %580 = vmatpush1.bf16.msra.mxu0 0
    %581 = vmatprep.subr.bf16.mxu0 0
    %582 = vmatpush1.bf16.msra.mxu0 0
    %583 = vmatprep.subr.bf16.mxu0 0
    %584 = vmatpush1.bf16.msra.mxu0 0
    %585 = vmatprep.subr.bf16.mxu0 0
    %586 = vmatpush1.bf16.msra.mxu0 0
    %587 = vmatprep.subr.bf16.mxu0 0
    %588 = vmatpush1.bf16.msra.mxu0 0
    %589 = vmatprep.mubr.bf16.mxu0 0
    %590 = vmatmul.mubr.bf16.gmra.mrb[0].mxu0 %v313
    %v591 = vpop.f32.mrb[0].mxu0
    %v592 = vadd.f32 0.0, %v591
    %v593 = vpop.f32.mrb[0].mxu0
    %v594 = vadd.f32 0.0, %v593
    %v595 = vpop.f32.mrb[0].mxu0
    %v596 = vpop.f32.mrb[0].mxu0
    %597 = vdwg.mxu0
    %v598 = vmul.f32 %v387, %v469
    %v599 = vmul.f32 %v389, %v471
    %v600 = vmul.f32 %v428, %v510
    %v601 = vmul.f32 %v430, %v512
    %v602 = vadd.f32 %v598, %v551
    %v603 = vadd.f32 %v599, %v553
    %v604 = vadd.f32 %v600, %v592
    %v605 = vadd.f32 %v601, %v594
    %v606 = vmax.f32 %v602, 0.0
    %v607 = vmax.f32 %v603, 0.0
    %v608 = vmax.f32 %v604, 0.0
    %v609 = vmax.f32 %v605, 0.0
    %v610 = vpack.c.bf16 %v606, %v606
    %v611 = vpack.c.bf16 %v607, %v607
    %v612 = vpack.c.bf16 %v608, %v608
    %v613 = vpack.c.bf16 %v609, %v609
    %v614 = vld [vmem:[#allocation7] sm:$0xff]
    %v615 = vld [vmem:[#allocation7 + $0x8] sm:$0xff]
    %v616 = vld [vmem:[#allocation7 + $0x10] sm:$0xff]
    %v617 = vld [vmem:[#allocation7 + $0x18] sm:$0xff]
    %v618 = vld [vmem:[#allocation7 + $0x20] sm:$0xff]
    %v619 = vld [vmem:[#allocation7 + $0x28] sm:$0xff]
    %v620 = vld [vmem:[#allocation7 + $0x30] sm:$0xff]
    %v621 = vld [vmem:[#allocation7 + $0x38] sm:$0xff]
    %v622 = vld [vmem:[#allocation7 + $0x40] sm:$0xff]
    %v623 = vld [vmem:[#allocation7 + $0x48] sm:$0xff]
    %v624 = vld [vmem:[#allocation7 + $0x50] sm:$0xff]
    %v625 = vld [vmem:[#allocation7 + $0x58] sm:$0xff]
    %v626 = vld [vmem:[#allocation7 + $0x60] sm:$0xff]
    %v627 = vld [vmem:[#allocation7 + $0x68] sm:$0xff]
    %v628 = vld [vmem:[#allocation7 + $0x70] sm:$0xff]
    %v629 = vld [vmem:[#allocation7 + $0x78] sm:$0xff]
    %v630 = vld [vmem:[#allocation7 + $0x80] sm:$0xff]
    %v631 = vld [vmem:[#allocation7 + $0x88] sm:$0xff]
    %v632 = vld [vmem:[#allocation7 + $0x90] sm:$0xff]
    %v633 = vld [vmem:[#allocation7 + $0x98] sm:$0xff]
    %v634 = vld [vmem:[#allocation7 + $0xa0] sm:$0xff]
    %v635 = vld [vmem:[#allocation7 + $0xa8] sm:$0xff]
    %v636 = vld [vmem:[#allocation7 + $0xb0] sm:$0xff]
    %v637 = vld [vmem:[#allocation7 + $0xb8] sm:$0xff]
    %v638 = vld [vmem:[#allocation7 + $0xc0] sm:$0xff]
    %v639 = vld [vmem:[#allocation7 + $0xc8] sm:$0xff]
    %v640 = vld [vmem:[#allocation7 + $0xd0] sm:$0xff]
    %v641 = vld [vmem:[#allocation7 + $0xd8] sm:$0xff]
    %v642 = vld [vmem:[#allocation7 + $0xe0] sm:$0xff]
    %v643 = vld [vmem:[#allocation7 + $0xe8] sm:$0xff]
    %v644 = vld [vmem:[#allocation7 + $0xf0] sm:$0xff]
    %v645 = vld [vmem:[#allocation7 + $0xf8] sm:$0xff]
    %v646 = vld [vmem:[#allocation7 + $0x100] sm:$0xff]
    %v647 = vld [vmem:[#allocation7 + $0x108] sm:$0xff]
    %v648 = vld [vmem:[#allocation7 + $0x110] sm:$0xff]
    %v649 = vld [vmem:[#allocation7 + $0x118] sm:$0xff]
    %v650 = vld [vmem:[#allocation7 + $0x120] sm:$0xff]
    %v651 = vld [vmem:[#allocation7 + $0x128] sm:$0xff]
    %v652 = vld [vmem:[#allocation7 + $0x130] sm:$0xff]
    %v653 = vld [vmem:[#allocation7 + $0x138] sm:$0xff]
    %v654 = vld [vmem:[#allocation7 + $0x140] sm:$0xff]
    %v655 = vld [vmem:[#allocation7 + $0x148] sm:$0xff]
    %v656 = vld [vmem:[#allocation7 + $0x150] sm:$0xff]
    %v657 = vld [vmem:[#allocation7 + $0x158] sm:$0xff]
    %v658 = vld [vmem:[#allocation7 + $0x160] sm:$0xff]
    %v659 = vld [vmem:[#allocation7 + $0x168] sm:$0xff]
    %v660 = vld [vmem:[#allocation7 + $0x170] sm:$0xff]
    %v661 = vld [vmem:[#allocation7 + $0x178] sm:$0xff]
    %v662 = vld [vmem:[#allocation7 + $0x180] sm:$0xff]
    %v663 = vld [vmem:[#allocation7 + $0x188] sm:$0xff]
    %v664 = vld [vmem:[#allocation7 + $0x190] sm:$0xff]
    %v665 = vld [vmem:[#allocation7 + $0x198] sm:$0xff]
    %v666 = vld [vmem:[#allocation7 + $0x1a0] sm:$0xff]
    %v667 = vld [vmem:[#allocation7 + $0x1a8] sm:$0xff]
    %v668 = vld [vmem:[#allocation7 + $0x1b0] sm:$0xff]
    %v669 = vld [vmem:[#allocation7 + $0x1b8] sm:$0xff]
    %v670 = vld [vmem:[#allocation7 + $0x1c0] sm:$0xff]
    %v671 = vld [vmem:[#allocation7 + $0x1c8] sm:$0xff]
    %v672 = vld [vmem:[#allocation7 + $0x1d0] sm:$0xff]
    %v673 = vld [vmem:[#allocation7 + $0x1d8] sm:$0xff]
    %v674 = vld [vmem:[#allocation7 + $0x1e0] sm:$0xff]
    %v675 = vld [vmem:[#allocation7 + $0x1e8] sm:$0xff]
    %v676 = vld [vmem:[#allocation7 + $0x1f0] sm:$0xff]
    %v677 = vld [vmem:[#allocation7 + $0x1f8] sm:$0xff]
    %v678 = vld [vmem:[%s3] sm:$0x3]
    %v680 = vlaneseq
    %v681 = vshrl.u32 %v680, 7
    %v682 = vsub.s32 0, %v681
    %v683 = vrot.slane %v678, %v682
    %v684 = vlaneseq
    %v685 = vshrl.u32 %v684, 7
    %v686 = vsub.s32 1, %v685
    %v687 = vrot.slane %v678, %v686
    %v754 = vunpack.c.l.b16 %v614
    %v755 = vunpack.c.h.b16 %v614
    %v756 = vunpack.c.l.b16 %v615
    %v757 = vunpack.c.h.b16 %v615
    %v758 = vunpack.c.l.b16 %v616
    %v759 = vunpack.c.h.b16 %v616
    %v760 = vunpack.c.l.b16 %v617
    %v761 = vunpack.c.h.b16 %v617
    %v762 = vunpack.c.l.b16 %v618
    %v763 = vunpack.c.h.b16 %v618
    %v764 = vunpack.c.l.b16 %v619
    %v765 = vunpack.c.h.b16 %v619
    %v766 = vunpack.c.l.b16 %v620
    %v767 = vunpack.c.h.b16 %v620
    %v768 = vunpack.c.l.b16 %v621
    %v769 = vunpack.c.h.b16 %v621
    %v770 = vunpack.c.l.b16 %v622
    %v771 = vunpack.c.h.b16 %v622
    %v772 = vunpack.c.l.b16 %v623
    %v773 = vunpack.c.h.b16 %v623
    %v774 = vunpack.c.l.b16 %v624
    %v775 = vunpack.c.h.b16 %v624
    %v776 = vunpack.c.l.b16 %v625
    %v777 = vunpack.c.h.b16 %v625
    %v778 = vunpack.c.l.b16 %v626
    %v779 = vunpack.c.h.b16 %v626
    %v780 = vunpack.c.l.b16 %v627
    %v781 = vunpack.c.h.b16 %v627
    %v782 = vunpack.c.l.b16 %v628
    %v783 = vunpack.c.h.b16 %v628
    %v784 = vunpack.c.l.b16 %v629
    %v785 = vunpack.c.h.b16 %v629
    %v786 = vunpack.c.l.b16 %v630
    %v787 = vunpack.c.h.b16 %v630
    %v788 = vunpack.c.l.b16 %v631
    %v789 = vunpack.c.h.b16 %v631
    %v790 = vunpack.c.l.b16 %v632
    %v791 = vunpack.c.h.b16 %v632
    %v792 = vunpack.c.l.b16 %v633
    %v793 = vunpack.c.h.b16 %v633
    %v794 = vunpack.c.l.b16 %v634
    %v795 = vunpack.c.h.b16 %v634
    %v796 = vunpack.c.l.b16 %v635
    %v797 = vunpack.c.h.b16 %v635
    %v798 = vunpack.c.l.b16 %v636
    %v799 = vunpack.c.h.b16 %v636
    %v800 = vunpack.c.l.b16 %v637
    %v801 = vunpack.c.h.b16 %v637
    %v802 = vunpack.c.l.b16 %v638
    %v803 = vunpack.c.h.b16 %v638
    %v804 = vunpack.c.l.b16 %v639
    %v805 = vunpack.c.h.b16 %v639
    %v806 = vunpack.c.l.b16 %v640
    %v807 = vunpack.c.h.b16 %v640
    %v808 = vunpack.c.l.b16 %v641
    %v809 = vunpack.c.h.b16 %v641
    %v810 = vunpack.c.l.b16 %v642
    %v811 = vunpack.c.h.b16 %v642
    %v812 = vunpack.c.l.b16 %v643
    %v813 = vunpack.c.h.b16 %v643
    %v814 = vunpack.c.l.b16 %v644
    %v815 = vunpack.c.h.b16 %v644
    %v816 = vunpack.c.l.b16 %v645
    %v817 = vunpack.c.h.b16 %v645
    %v818 = vunpack.c.l.b16 %v646
    %v819 = vunpack.c.h.b16 %v646
    %v820 = vunpack.c.l.b16 %v647
    %v821 = vunpack.c.h.b16 %v647
    %v822 = vunpack.c.l.b16 %v648
    %v823 = vunpack.c.h.b16 %v648
    %v824 = vunpack.c.l.b16 %v649
    %v825 = vunpack.c.h.b16 %v649
    %v826 = vunpack.c.l.b16 %v650
    %v827 = vunpack.c.h.b16 %v650
    %v828 = vunpack.c.l.b16 %v651
    %v829 = vunpack.c.h.b16 %v651
    %v830 = vunpack.c.l.b16 %v652
    %v831 = vunpack.c.h.b16 %v652
    %v832 = vunpack.c.l.b16 %v653
    %v833 = vunpack.c.h.b16 %v653
    %v834 = vunpack.c.l.b16 %v654
    %v835 = vunpack.c.h.b16 %v654
    %v836 = vunpack.c.l.b16 %v655
    %v837 = vunpack.c.h.b16 %v655
    %v838 = vunpack.c.l.b16 %v656
    %v839 = vunpack.c.h.b16 %v656
    %v840 = vunpack.c.l.b16 %v657
    %v841 = vunpack.c.h.b16 %v657
    %v842 = vunpack.c.l.b16 %v658
    %v843 = vunpack.c.h.b16 %v658
    %v844 = vunpack.c.l.b16 %v659
    %v845 = vunpack.c.h.b16 %v659
    %v846 = vunpack.c.l.b16 %v660
    %v847 = vunpack.c.h.b16 %v660
    %v848 = vunpack.c.l.b16 %v661
    %v849 = vunpack.c.h.b16 %v661
    %v850 = vunpack.c.l.b16 %v662
    %v851 = vunpack.c.h.b16 %v662
    %v852 = vunpack.c.l.b16 %v663
    %v853 = vunpack.c.h.b16 %v663
    %v854 = vunpack.c.l.b16 %v664
    %v855 = vunpack.c.h.b16 %v664
    %v856 = vunpack.c.l.b16 %v665
    %v857 = vunpack.c.h.b16 %v665
    %v858 = vunpack.c.l.b16 %v666
    %v859 = vunpack.c.h.b16 %v666
    %v860 = vunpack.c.l.b16 %v667
    %v861 = vunpack.c.h.b16 %v667
    %v862 = vunpack.c.l.b16 %v668
    %v863 = vunpack.c.h.b16 %v668
    %v864 = vunpack.c.l.b16 %v669
    %v865 = vunpack.c.h.b16 %v669
    %v866 = vunpack.c.l.b16 %v670
    %v867 = vunpack.c.h.b16 %v670
    %v868 = vunpack.c.l.b16 %v671
    %v869 = vunpack.c.h.b16 %v671
    %v870 = vunpack.c.l.b16 %v672
    %v871 = vunpack.c.h.b16 %v672
    %v872 = vunpack.c.l.b16 %v673
    %v873 = vunpack.c.h.b16 %v673
    %v874 = vunpack.c.l.b16 %v674
    %v875 = vunpack.c.h.b16 %v674
    %v876 = vunpack.c.l.b16 %v675
    %v877 = vunpack.c.h.b16 %v675
    %v878 = vunpack.c.l.b16 %v676
    %v879 = vunpack.c.h.b16 %v676
    %v880 = vunpack.c.l.b16 %v677
    %v881 = vunpack.c.h.b16 %v677
    %v882 = vpack.c.b16 %v756, %v754
    %v883 = vpack.c.b16 %v757, %v755
    %v884 = vpack.c.b16 %v760, %v758
    %v885 = vpack.c.b16 %v761, %v759
    %v886 = vpack.c.b16 %v764, %v762
    %v887 = vpack.c.b16 %v765, %v763
    %v888 = vpack.c.b16 %v768, %v766
    %v889 = vpack.c.b16 %v769, %v767
    %v890 = vpack.c.b16 %v772, %v770
    %v891 = vpack.c.b16 %v773, %v771
    %v892 = vpack.c.b16 %v776, %v774
    %v893 = vpack.c.b16 %v777, %v775
    %v894 = vpack.c.b16 %v780, %v778
    %v895 = vpack.c.b16 %v781, %v779
    %v896 = vpack.c.b16 %v784, %v782
    %v897 = vpack.c.b16 %v785, %v783
    %v898 = vpack.c.b16 %v788, %v786
    %v899 = vpack.c.b16 %v789, %v787
    %v900 = vpack.c.b16 %v792, %v790
    %v901 = vpack.c.b16 %v793, %v791
    %v902 = vpack.c.b16 %v796, %v794
    %v903 = vpack.c.b16 %v797, %v795
    %v904 = vpack.c.b16 %v800, %v798
    %v905 = vpack.c.b16 %v801, %v799
    %v906 = vpack.c.b16 %v804, %v802
    %v907 = vpack.c.b16 %v805, %v803
    %v908 = vpack.c.b16 %v808, %v806
    %v909 = vpack.c.b16 %v809, %v807
    %v910 = vpack.c.b16 %v812, %v810
    %v911 = vpack.c.b16 %v813, %v811
    %v912 = vpack.c.b16 %v816, %v814
    %v913 = vpack.c.b16 %v817, %v815
    %v914 = vpack.c.b16 %v820, %v818
    %v915 = vpack.c.b16 %v821, %v819
    %v916 = vpack.c.b16 %v824, %v822
    %v917 = vpack.c.b16 %v825, %v823
    %v918 = vpack.c.b16 %v828, %v826
    %v919 = vpack.c.b16 %v829, %v827
    %v920 = vpack.c.b16 %v832, %v830
    %v921 = vpack.c.b16 %v833, %v831
    %v922 = vpack.c.b16 %v836, %v834
    %v923 = vpack.c.b16 %v837, %v835
    %v924 = vpack.c.b16 %v840, %v838
    %v925 = vpack.c.b16 %v841, %v839
    %v926 = vpack.c.b16 %v844, %v842
    %v927 = vpack.c.b16 %v845, %v843
    %v928 = vpack.c.b16 %v848, %v846
    %v929 = vpack.c.b16 %v849, %v847
    %v930 = vpack.c.b16 %v852, %v850
    %v931 = vpack.c.b16 %v853, %v851
    %v932 = vpack.c.b16 %v856, %v854
    %v933 = vpack.c.b16 %v857, %v855
    %v934 = vpack.c.b16 %v860, %v858
    %v935 = vpack.c.b16 %v861, %v859
    %v936 = vpack.c.b16 %v864, %v862
    %v937 = vpack.c.b16 %v865, %v863
    %v938 = vpack.c.b16 %v868, %v866
    %v939 = vpack.c.b16 %v869, %v867
    %v940 = vpack.c.b16 %v872, %v870
    %v941 = vpack.c.b16 %v873, %v871
    %v942 = vpack.c.b16 %v876, %v874
    %v943 = vpack.c.b16 %v877, %v875
    %v944 = vpack.c.b16 %v880, %v878
    %v945 = vpack.c.b16 %v881, %v879
    %1010 = vmatprep.subr.bf16.mxu0 %v883
    %1011 = vmatpush1.bf16.msra.mxu0 %v882
    %1012 = vmatprep.subr.bf16.mxu0 %v885
    %1013 = vmatpush1.bf16.msra.mxu0 %v884
    %1014 = vmatprep.subr.bf16.mxu0 %v887
    %1015 = vmatpush1.bf16.msra.mxu0 %v886
    %1016 = vmatprep.subr.bf16.mxu0 %v889
    %1017 = vmatpush1.bf16.msra.mxu0 %v888
    %1018 = vmatprep.subr.bf16.mxu0 %v891
    %1019 = vmatpush1.bf16.msra.mxu0 %v890
    %1020 = vmatprep.subr.bf16.mxu0 %v893
    %1021 = vmatpush1.bf16.msra.mxu0 %v892
    %1022 = vmatprep.subr.bf16.mxu0 %v895
    %1023 = vmatpush1.bf16.msra.mxu0 %v894
    %1024 = vmatprep.subr.bf16.mxu0 %v897
    %1025 = vmatpush1.bf16.msra.mxu0 %v896
    %1026 = vmatprep.subr.bf16.mxu0 %v899
    %1027 = vmatpush1.bf16.msra.mxu0 %v898
    %1028 = vmatprep.subr.bf16.mxu0 %v901
    %1029 = vmatpush1.bf16.msra.mxu0 %v900
    %1030 = vmatprep.subr.bf16.mxu0 %v903
    %1031 = vmatpush1.bf16.msra.mxu0 %v902
    %1032 = vmatprep.subr.bf16.mxu0 %v905
    %1033 = vmatpush1.bf16.msra.mxu0 %v904
    %1034 = vmatprep.subr.bf16.mxu0 %v907
    %1035 = vmatpush1.bf16.msra.mxu0 %v906
    %1036 = vmatprep.subr.bf16.mxu0 %v909
    %1037 = vmatpush1.bf16.msra.mxu0 %v908
    %1038 = vmatprep.subr.bf16.mxu0 %v911
    %1039 = vmatpush1.bf16.msra.mxu0 %v910
    %1040 = vmatprep.subr.bf16.mxu0 %v913
    %1041 = vmatpush1.bf16.msra.mxu0 %v912
    %1042 = vmatprep.mubr.bf16.mxu0 %v611
    %1043 = vmatmul.mubr.bf16.gmra.mrb[0].mxu0 %v610
    %v1044 = vpop.f32.mrb[0].mxu0
    %v1045 = vadd.f32 %v683, %v1044
    %v1046 = vpop.f32.mrb[0].mxu0
    %v1047 = vadd.f32 %v687, %v1046
    %v1048 = vpop.f32.mrb[0].mxu0
    %v1049 = vpop.f32.mrb[0].mxu0
    %1050 = vdwg.mxu0
    %1051 = vmatprep.subr.bf16.mxu0 %v915
    %1052 = vmatpush1.bf16.msra.mxu0 %v914
    %1053 = vmatprep.subr.bf16.mxu0 %v917
    %1054 = vmatpush1.bf16.msra.mxu0 %v916
    %1055 = vmatprep.subr.bf16.mxu0 %v919
    %1056 = vmatpush1.bf16.msra.mxu0 %v918
    %1057 = vmatprep.subr.bf16.mxu0 %v921
    %1058 = vmatpush1.bf16.msra.mxu0 %v920
    %1059 = vmatprep.subr.bf16.mxu0 %v923
    %1060 = vmatpush1.bf16.msra.mxu0 %v922
    %1061 = vmatprep.subr.bf16.mxu0 %v925
    %1062 = vmatpush1.bf16.msra.mxu0 %v924
    %1063 = vmatprep.subr.bf16.mxu0 %v927
    %1064 = vmatpush1.bf16.msra.mxu0 %v926
    %1065 = vmatprep.subr.bf16.mxu0 %v929
    %1066 = vmatpush1.bf16.msra.mxu0 %v928
    %1067 = vmatprep.subr.bf16.mxu0 %v931
    %1068 = vmatpush1.bf16.msra.mxu0 %v930
    %1069 = vmatprep.subr.bf16.mxu0 %v933
    %1070 = vmatpush1.bf16.msra.mxu0 %v932
    %1071 = vmatprep.subr.bf16.mxu0 %v935
    %1072 = vmatpush1.bf16.msra.mxu0 %v934
    %1073 = vmatprep.subr.bf16.mxu0 %v937
    %1074 = vmatpush1.bf16.msra.mxu0 %v936
    %1075 = vmatprep.subr.bf16.mxu0 %v939
    %1076 = vmatpush1.bf16.msra.mxu0 %v938
    %1077 = vmatprep.subr.bf16.mxu0 %v941
    %1078 = vmatpush1.bf16.msra.mxu0 %v940
    %1079 = vmatprep.subr.bf16.mxu0 %v943
    %1080 = vmatpush1.bf16.msra.mxu0 %v942
    %1081 = vmatprep.subr.bf16.mxu0 %v945
    %1082 = vmatpush1.bf16.msra.mxu0 %v944
    %1083 = vmatprep.mubr.bf16.mxu0 %v613
    %1084 = vmatmul.mubr.bf16.gmra.mrb[0].mxu0 %v612
    %v1085 = vpop.f32.mrb[0].mxu0
    %v1086 = vadd.f32 %v1045, %v1085
    %v1087 = vpop.f32.mrb[0].mxu0
    %v1088 = vadd.f32 %v1047, %v1087
    %v1089 = vpop.f32.mrb[0].mxu0
    %v1090 = vpop.f32.mrb[0].mxu0
    %1091 = vdwg.mxu0
    %v1092 = vtanh.pop %v1086
    %v1093 = vtanh.pop %v1088
    %1094 = vst [vmem:[#allocation8] sm:$0xff] %v1092
    %1095 = vst [vmem:[#allocation8 + $0x8] sm:$0xff] %v1093
    // Predicated region
    $region30: #{tpu_custom_call.1} parent=1 // pred_check
      _
    $region31: #{tpu_custom_call.1} parent=1 // pred_check_branch
      %1097 = sbr.rel (0) target = $region33
    $region32: #{tpu_custom_call.1} parent=1 // pred_region
      %s1099 = ssub.s32 256, 256
      %1100 = vsyncadd [#allocation4], %s1099
      %s1102 = sshll.u32 [#allocation8], 4
      %s1103 = int_to_ptr.vmem [resolvable:$true] %s1102
      %1105 = dma.vmem_to_hbm [thread:$0]  %s1103, 256, %s4, [#allocation4]
    $region33: #{tpu_custom_call.1} parent=1 // pred_fallthru
      _
    // Predicated region
    $region34: #{tpu_custom_call.1} parent=1 // pred_check
      _
    $region35: #{tpu_custom_call.1} parent=1 // pred_check_branch
      %1107 = sbr.rel (0) target = $region37
    $region36: #{tpu_custom_call.1} parent=1 // pred_region
      %1108 = dma.done [#allocation4], 256
    $region37: #{tpu_custom_call.1} parent=1 // pred_fallthru
      _
    %1109 = vsyncpa [#allocation3], 1
    %1110 = vsyncpa [#allocation6], 1
    %1111 = vsyncpa [#allocation4], 1

</llo_original>
